<compile_context>
chip_gen: v5e
topology: v5e:2x2
jax: 0.10.0
libtpu: 0.0.40
codegen_flags: <defaults>
</compile_context>

<pallas_src>
import numpy as np
import jax
import jax.numpy as jnp
from jax import lax
from jax.experimental import pallas as pl
from jax.experimental.pallas import tpu as pltpu


def _bayias_loss_kernel(x_ref, bias_ref, tgt_ref, wt_ref, out_ref):
    # (tn, C) logits for this batch tile; upcast supports bf16 inputs.
    adj = x_ref[...].astype(jnp.float32) + bias_ref[...]

    # numerically-stable log-sum-exp over the class (lane) axis
    m = jnp.max(adj, axis=-1, keepdims=True)                       # (tn, 1)
    lse = jnp.log(jnp.sum(jnp.exp(adj - m), axis=-1, keepdims=True)) + m

    # logits[target] via predicated lane reduction (no f32 one-hot materialized)
    cls = lax.broadcasted_iota(jnp.int32, adj.shape, 1)             # (tn, C)
    picked = jnp.sum(jnp.where(cls == tgt_ref[...], adj, 0.0),
                     axis=-1, keepdims=True)                        # (tn, 1)

    out_ref[...] = (lse - picked) * wt_ref[...]                     # (tn, 1)


def _choose_tile_n(n, c, itemsize):
    """Largest row tile that keeps a double-buffered x tile (+ f32 intermediates)
    comfortably inside a 32 MiB scoped-VMEM budget: ~512K elements per x tile."""
    tile = min(1024, max(8, (1 << 19) // max(c, 1)))
    # respect sublane packing of the input dtype (f32:8, bf16:16, int8/fp8:32)
    mult = 8 if itemsize >= 4 else (16 if itemsize == 2 else 32)
    tile = max(mult, (tile // mult) * mult)
    n_pad = ((n + mult - 1) // mult) * mult
    return min(tile, n_pad)


def bayias_compensated_loss(x, target, prior, inf, weight=None):
    """x: (N, C) f32/bf16, target: (N,) int, prior/inf/weight: (C,) -> (N,) f32."""
    n, c = x.shape
    tile_n = _choose_tile_n(n, c, jnp.dtype(x.dtype).itemsize)
    n_pad = ((n + tile_n - 1) // tile_n) * tile_n

    # Fold the two per-class vectors into a single resident bias row.
    bias = (prior.astype(jnp.float32) - inf.astype(jnp.float32)).reshape(1, c)

    # Gather weight[target] on the host side of the kernel (cheap XLA gather).
    if weight is None:
        w_t = jnp.ones((n,), jnp.float32)
    else:
        w_t = weight.astype(jnp.float32)[target]
    tgt = target.astype(jnp.int32)

    if n_pad != n:
        pad = n_pad - n
        x = jnp.pad(x, ((0, pad), (0, 0)))
        tgt = jnp.pad(tgt, (0, pad))          # padded rows: class 0
        w_t = jnp.pad(w_t, (0, pad))          # padded rows: weight 0 -> loss 0

    tgt2 = tgt.reshape(n_pad, 1)
    wt2 = w_t.reshape(n_pad, 1)

    out = pl.pallas_call(
        _bayias_loss_kernel,
        out_shape=jax.ShapeDtypeStruct((n_pad, 1), jnp.float32),
        grid_spec=pltpu.PrefetchScalarGridSpec(
            num_scalar_prefetch=0,
            grid=(n_pad // tile_n,),
            in_specs=[
                pl.BlockSpec((tile_n, c), lambda i: (i, 0)),   # x tile
                pl.BlockSpec((1, c), lambda i: (0, 0)),        # bias (resident)
                pl.BlockSpec((tile_n, 1), lambda i: (i, 0)),   # target column
                pl.BlockSpec((tile_n, 1), lambda i: (i, 0)),   # weight[target] column
            ],
            out_specs=pl.BlockSpec((tile_n, 1), lambda i: (i, 0)),
        ),
        compiler_params=pltpu.CompilerParams(
            dimension_semantics=("parallel",),
            vmem_limit_bytes=32 * 1024 * 1024,
        ),
    )(x, bias, tgt2, wt2)

    return out[:n, 0]


def _reference(x, target, prior, inf, weight):
    logits = x.astype(jnp.float32) + prior[None, :] - inf[None, :]
    lse = jax.nn.logsumexp(logits, axis=-1)
    picked = jnp.take_along_axis(logits, target[:, None], axis=-1)[:, 0]
    w = jnp.ones_like(prior) if weight is None else weight
    return (lse - picked) * w[target]


if __name__ == "__main__":
    N, C = 8, 32  # batch, num classes (small demo shapes)

    # Deterministic "class count" statistics (what the module's __init__ builds from).
    train_cls_num_list = np.arange(1, C + 1, dtype=np.float64) * 10.0
    inf_label_distribution = np.ones(C, dtype=np.float64)

    prior = jnp.asarray(np.log(train_cls_num_list / train_cls_num_list.sum()),
                        dtype=jnp.float32)
    inf = jnp.asarray(np.log(inf_label_distribution / inf_label_distribution.sum()),
                      dtype=jnp.float32)
    weight = jnp.linspace(0.5, 1.5, C, dtype=jnp.float32)  # exercise the weight path

    key = jax.random.PRNGKey(0)
    kx, kt = jax.random.split(key)
    x = jax.random.normal(kx, (N, C), dtype=jnp.float32)
    target = jax.random.randint(kt, (N,), 0, C, dtype=jnp.int32)

    loss = bayias_compensated_loss(x, target, prior, inf, weight)
    loss = jax.block_until_ready(loss)

    ref = _reference(x, target, prior, inf, weight)
    np.testing.assert_allclose(np.asarray(loss), np.asarray(ref), rtol=1e-5, atol=1e-5)

    # Also check the module-default weight=None path.
    loss_nw = jax.block_until_ready(bayias_compensated_loss(x, target, prior, inf, None))
    ref_nw = _reference(x, target, prior, inf, None)
    np.testing.assert_allclose(np.asarray(loss_nw), np.asarray(ref_nw),
                               rtol=1e-5, atol=1e-5)

    print("KERNEL_OK")
</pallas_src>

<mosaic_0001>
module attributes {stable_mosaic.version = 11 : i64} {
  func.func @_bayias_loss_kernel(%arg0: i32, %arg1: memref<8x32xf32, #tpu.memory_space<vmem>>, %arg2: memref<1x32xf32, #tpu.memory_space<vmem>>, %arg3: memref<8x1xi32, #tpu.memory_space<vmem>>, %arg4: memref<8x1xf32, #tpu.memory_space<vmem>>, %arg5: memref<8x1xf32, #tpu.memory_space<vmem>>) attributes {dimension_semantics = [#tpu.dimension_semantics<parallel>], iteration_bounds = array<i64: 1>, scalar_prefetch = 0 : i64, scratch_operands = 0 : i64, tpu.core_type = #tpu.core_type<tc>, window_params = [{transform_indices = @transform_0, window_bounds = array<i64: 8, 32>}, {pipeline_mode = #tpu.pipeline_mode<synchronous>, transform_indices = @transform_1, window_bounds = array<i64: 1, 32>}, {transform_indices = @transform_2, window_bounds = array<i64: 8, 1>}, {transform_indices = @transform_3, window_bounds = array<i64: 8, 1>}, {transform_indices = @transform_4, window_bounds = array<i64: 8, 1>}]} {
    %c0 = arith.constant 0 : index
    %c0_0 = arith.constant 0 : index
    %0 = vector.load %arg1[%c0, %c0_0] : memref<8x32xf32, #tpu.memory_space<vmem>>, vector<8x32xf32>
    %c0_1 = arith.constant 0 : index
    %c0_2 = arith.constant 0 : index
    %1 = vector.load %arg2[%c0_1, %c0_2] : memref<1x32xf32, #tpu.memory_space<vmem>>, vector<1x32xf32>
    %2 = vector.broadcast %1 : vector<1x32xf32> to vector<8x32xf32>
    %3 = arith.addf %0, %2 : vector<8x32xf32>
    %cst = arith.constant dense<0xFF800000> : vector<8xf32>
    %4 = vector.multi_reduction <maximumf>, %3, %cst [1] : vector<8x32xf32> to vector<8xf32>
    %5 = vector.shape_cast %4 : vector<8xf32> to vector<8x1xf32>
    %6 = vector.broadcast %5 : vector<8x1xf32> to vector<8x32xf32>
    %7 = arith.subf %3, %6 : vector<8x32xf32>
    %8 = math.exp %7 : vector<8x32xf32>
    %cst_3 = arith.constant dense<0.000000e+00> : vector<8xf32>
    %9 = vector.multi_reduction <add>, %8, %cst_3 [1] : vector<8x32xf32> to vector<8xf32>
    %10 = vector.shape_cast %9 : vector<8xf32> to vector<8x1xf32>
    %11 = math.log %10 : vector<8x1xf32>
    %12 = arith.addf %11, %5 : vector<8x1xf32>
    %13 = tpu.iota {dimensions = array<i32: 1>} : vector<8x32xi32>
    %c0_4 = arith.constant 0 : index
    %c0_5 = arith.constant 0 : index
    %14 = vector.load %arg3[%c0_4, %c0_5] : memref<8x1xi32, #tpu.memory_space<vmem>>, vector<8x1xi32>
    %15 = vector.broadcast %14 : vector<8x1xi32> to vector<8x32xi32>
    %16 = arith.cmpi eq, %13, %15 : vector<8x32xi32>
    %cst_6 = arith.constant 0.000000e+00 : f32
    %17 = vector.broadcast %cst_6 : f32 to vector<8x32xf32>
    %18 = arith.select %16, %3, %17 : vector<8x32xi1>, vector<8x32xf32>
    %cst_7 = arith.constant dense<0.000000e+00> : vector<8xf32>
    %19 = vector.multi_reduction <add>, %18, %cst_7 [1] : vector<8x32xf32> to vector<8xf32>
    %20 = vector.shape_cast %19 : vector<8xf32> to vector<8x1xf32>
    %21 = arith.subf %12, %20 : vector<8x1xf32>
    %c0_8 = arith.constant 0 : index
    %c0_9 = arith.constant 0 : index
    %22 = vector.load %arg4[%c0_8, %c0_9] : memref<8x1xf32, #tpu.memory_space<vmem>>, vector<8x1xf32>
    %23 = arith.mulf %21, %22 : vector<8x1xf32>
    %c0_10 = arith.constant 0 : index
    %c0_11 = arith.constant 0 : index
    %24 = vector.load %arg5[%c0_10, %c0_11] : memref<8x1xf32, #tpu.memory_space<vmem>>, vector<8x1xf32>
    tpu.vector_store %arg5[%c0_10, %c0_11], %23 {strides = array<i32>} : memref<8x1xf32, #tpu.memory_space<vmem>>, vector<8x1xf32>,
    return
  }
  func.func @transform_0(%arg0: i32) -> (i32, i32) {
    %c0_i32 = arith.constant 0 : i32
    %c0_i32_0 = arith.constant 0 : i32
    return %arg0, %c0_i32 : i32, i32
  }
  func.func @transform_1(%arg0: i32) -> (i32, i32) {
    %c0_i32 = arith.constant 0 : i32
    %c0_i32_0 = arith.constant 0 : i32
    %c0_i32_1 = arith.constant 0 : i32
    return %c0_i32, %c0_i32_0 : i32, i32
  }
  func.func @transform_2(%arg0: i32) -> (i32, i32) {
    %c0_i32 = arith.constant 0 : i32
    %c0_i32_0 = arith.constant 0 : i32
    return %arg0, %c0_i32 : i32, i32
  }
  func.func @transform_3(%arg0: i32) -> (i32, i32) {
    %c0_i32 = arith.constant 0 : i32
    %c0_i32_0 = arith.constant 0 : i32
    return %arg0, %c0_i32 : i32, i32
  }
  func.func @transform_4(%arg0: i32) -> (i32, i32) {
    %c0_i32 = arith.constant 0 : i32
    %c0_i32_0 = arith.constant 0 : i32
    return %arg0, %c0_i32 : i32, i32
  }
}

</mosaic_0001>

<llo_original>
// kernel: tpu_custom_call.1
$region0: #{tpu_custom_call.1}
  #allocation0 [shape = 'u32[]', space=smem, size = 0x4, offset = 0x4, fixed_abs, tag = 'smem constant byte address 0x4 - core index']
  #allocation1 [shape = 'u32[72,128]{1,0:T(1,128)}', space=vmem, size = 0x9000, scoped, tag = 'internal scratch']
  %s0 = inlined_call_operand.vmem [shape: f32[8,32], index: 0, kind: input, shape index: {}]
  %s1 = inlined_call_operand.vmem [shape: f32[1,32], index: 1, kind: input, shape index: {}]
  %s2 = inlined_call_operand.vmem [shape: s32[8,1], index: 2, kind: input, shape index: {}]
  %s3 = inlined_call_operand.vmem [shape: f32[8,1], index: 3, kind: input, shape index: {}]
  %s4 = inlined_call_operand.vmem [shape: f32[8,1], index: 4, kind: output, shape index: {}]
  %s5 = sld [smem:[#allocation0]]
  $region26: #{tpu_custom_call.1} parent=0
    _
  %s7 = ssub.s32 1, %s5
  %s8 = scalar_select 0, %s7, %s5
  // Predicated region
  $region2: #{tpu_custom_call.1} parent=0 // pred_check
    _
  $region3: #{tpu_custom_call.1} parent=0 // pred_check_branch
    %10 = sbr.rel (0) target = $region5
  $region4: #{tpu_custom_call.1} parent=0 // pred_region
    _
  $region5: #{tpu_custom_call.1} parent=0 // pred_fallthru
    _
  // Predicated region
  $region6: #{tpu_custom_call.1} parent=0 // pred_check
    _
  $region7: #{tpu_custom_call.1} parent=0 // pred_check_branch
    %12 = sbr.rel (0) target = $region9
  $region8: #{tpu_custom_call.1} parent=0 // pred_region
    _
  $region9: #{tpu_custom_call.1} parent=0 // pred_fallthru
    _
  // Predicated region
  $region10: #{tpu_custom_call.1} parent=0 // pred_check
    _
  $region11: #{tpu_custom_call.1} parent=0 // pred_check_branch
    %14 = sbr.rel (0) target = $region13
  $region12: #{tpu_custom_call.1} parent=0 // pred_region
    _
  $region13: #{tpu_custom_call.1} parent=0 // pred_fallthru
    _
  // Predicated region
  $region14: #{tpu_custom_call.1} parent=0 // pred_check
    _
  $region15: #{tpu_custom_call.1} parent=0 // pred_check_branch
    %16 = sbr.rel (0) target = $region17
  $region16: #{tpu_custom_call.1} parent=0 // pred_region
    _
  $region17: #{tpu_custom_call.1} parent=0 // pred_fallthru
    _
  %v17 = vld [vmem:[%s0] sm:$0xff]
  %v18 = vld [vmem:[%s1] sm:$0x1]
  %v20 = vperm.slane %v18, 0
  %v22 = vadd.f32 %v17, %v20
  %vm23 = vcmask 261120
  %v24 = vsel %vm23, %v22, -inf
  %25 = vmax.xlane.f32.xlu0 %v24
  %v26 = vpop.xlane.xlu0 %25
  %v27 = vsub.f32 %v22, %v26
  %v28 = vmul.f32 %v27, 1.442695
  %v29 = vpow.pop %v28
  %v30 = vsel %vm23, %v29, 0.0
  %31 = vadd.xlane.f32.xlu0 %v30
  %v32 = vpop.xlane.xlu0 %31
  %v33 = vlog2.pop %v32
  %v34 = vmul.f32 %v33, 0.6931472
  %v35 = vadd.f32 %v34, %v26
  %v36 = vlaneseq
  %v37 = vand.u32 %v36, 127
  %v38 = vld [vmem:[%s2] sm:$0xff]
  %39 = vset.pattern.permute.xlu0 0
  %40 = vperm.xlu0 %39, %v38
  %v41 = vpop.permute.xlu0 %40
  %vm42 = vcmp.eq.s32.totalorder %v37, %v41
  %v43 = vsel %vm42, %v22, 0.0
  %v44 = vsel %vm23, %v43, 0.0
  %45 = vadd.xlane.f32.xlu0 %v44
  %v46 = vpop.xlane.xlu0 %45
  %v47 = vsub.f32 %v35, %v46
  %v48 = vld [vmem:[%s3] sm:$0xff]
  %v49 = vmul.f32 %v47, %v48
  %vm50 = vcmask 7168
  %51 = vst.msk [vmem:[%s4] sm:$0xff] %vm50, %v49
  // Predicated region
  $region18: #{tpu_custom_call.1} parent=0 // pred_check
    _
  $region19: #{tpu_custom_call.1} parent=0 // pred_check_branch
    %53 = sbr.rel (0) target = $region21
  $region20: #{tpu_custom_call.1} parent=0 // pred_region
    _
  $region21: #{tpu_custom_call.1} parent=0 // pred_fallthru
    _
  // Predicated region
  $region22: #{tpu_custom_call.1} parent=0 // pred_check
    _
  $region23: #{tpu_custom_call.1} parent=0 // pred_check_branch
    %55 = sbr.rel (0) target = $region25
  $region24: #{tpu_custom_call.1} parent=0 // pred_region
    _
  $region25: #{tpu_custom_call.1} parent=0 // pred_fallthru
    _

</llo_original>
